<compile_context>
chip_gen: v5e
topology: v5e:2x2
jax: 0.10.0
libtpu: 0.0.40
codegen_flags: <defaults>
</compile_context>

<pallas_src>
import functools

import jax
import jax.numpy as jnp
from jax import lax
from jax.experimental import pallas as pl
from jax.experimental.pallas import tpu as pltpu


def _label_smoothing_kernel(x_ref, tgt_ref, out_ref, *, smoothing, n_rows, tile_n):
    i = pl.program_id(0)
    n_tiles = pl.num_programs(0)

    @pl.when(i == 0)
    def _init():
        out_ref[...] = jnp.zeros_like(out_ref)

    confidence = jnp.float32(1.0 - smoothing)

    x = x_ref[...].astype(jnp.float32)          # (TILE_N, C)
    tgt = tgt_ref[...]                          # (TILE_N, 1) int32
    tn, c = x.shape

    # --- numerically stable log-sum-exp pieces ---
    x_max = jnp.max(x, axis=-1, keepdims=True)                        # (TILE_N, 1)
    shifted = x - x_max                                               # (TILE_N, C)
    lse = jnp.log(jnp.sum(jnp.exp(shifted), axis=-1, keepdims=True))  # (TILE_N, 1)

    # --- folded loss: loss_row = lse - sum_j shifted_j * w_j,
    #     w_j = smoothing/C + confidence * [j == target] ---
    col_ids = lax.broadcasted_iota(jnp.int32, (tn, c), dimension=1)   # (TILE_N, C)
    base_w = jnp.float32(smoothing / c)
    w = jnp.where(col_ids == tgt, base_w + confidence, base_w)        # (TILE_N, C)
    weighted = jnp.sum(shifted * w, axis=-1, keepdims=True)           # (TILE_N, 1)

    loss_row = lse - weighted                                         # (TILE_N, 1)

    # --- mask padded rows of the (possibly partial) final tile ---
    row_ids = i * tile_n + lax.broadcasted_iota(jnp.int32, (tn, 1), dimension=0)
    valid = row_ids < n_rows
    tile_sum = jnp.sum(jnp.where(valid, loss_row, 0.0), keepdims=True)  # (1, 1)

    out_ref[...] += tile_sum

    @pl.when(i == n_tiles - 1)
    def _finalize():
        out_ref[...] = out_ref[...] / jnp.float32(n_rows)


def label_smoothing_loss(x, target, smoothing=0.1, tile_n=None):
    """x: (N, C) float logits; target: (N,) int class indices. Returns scalar f32."""
    n, c = x.shape
    itemsize = jnp.dtype(x.dtype).itemsize
    min_tile = 16 if itemsize < 4 else 8   # bf16 sublane packing needs 16 rows

    if tile_n is None:
        # Largest row tile whose double-buffered logits stay under ~8 MiB.
        budget = 8 * 1024 * 1024
        t = budget // max(1, 2 * c * itemsize)
        t = (t // min_tile) * min_tile
        tile_n = int(max(min_tile, min(512, t)))
    # Keep the tile no larger than N rounded down to the sublane multiple.
    tile_n = max(min_tile, (min(tile_n, max(n, min_tile)) // min_tile) * min_tile)

    num_tiles = pl.cdiv(n, tile_n)
    tgt2d = target.astype(jnp.int32).reshape(n, 1)

    kernel = functools.partial(
        _label_smoothing_kernel,
        smoothing=float(smoothing),
        n_rows=int(n),
        tile_n=int(tile_n),
    )

    # Advisory cost for XLA scheduling around the custom call.
    cost = pl.CostEstimate(
        flops=int(6 * n * c),
        transcendentals=int(n * c),
        bytes_accessed=int(n * c * itemsize + n * 4 + 4),
    )

    # VMEM budget: double-buffered inputs + f32 temps headroom (capped for v7x).
    vmem_need = 2 * tile_n * c * itemsize + 2 * tile_n * 128 * 4 + 4 * tile_n * c * 4
    vmem_limit = int(min(max(vmem_need + (2 << 20), 16 * 1024 * 1024),
                         48 * 1024 * 1024))

    out = pl.pallas_call(
        kernel,
        out_shape=jax.ShapeDtypeStruct((1, 1), jnp.float32),
        grid=(num_tiles,),
        in_specs=[
            pl.BlockSpec((tile_n, c), lambda i: (i, 0)),
            pl.BlockSpec((tile_n, 1), lambda i: (i, 0)),
        ],
        out_specs=pl.BlockSpec((1, 1), lambda i: (0, 0)),
        compiler_params=pltpu.CompilerParams(
            dimension_semantics=("arbitrary",),
            vmem_limit_bytes=vmem_limit,
        ),
        cost_estimate=cost,
    )(x, tgt2d)
    return out[0, 0]


def _reference(x, target, smoothing=0.1):
    confidence = 1.0 - smoothing
    logprobs = jax.nn.log_softmax(x.astype(jnp.float32), axis=-1)
    nll = -jnp.take_along_axis(logprobs, target[:, None], axis=-1)[:, 0]
    smooth = -jnp.mean(logprobs, axis=-1)
    return jnp.mean(confidence * nll + smoothing * smooth)


if __name__ == "__main__":
    key = jax.random.PRNGKey(0)
    kx, kt = jax.random.split(key)

    N, C = 20, 32          # N chosen so the last row tile is partial (masking path)
    smoothing = 0.1

    x = jax.random.normal(kx, (N, C), dtype=jnp.float32)
    target = jax.random.randint(kt, (N,), 0, C, dtype=jnp.int32)

    ref = _reference(x, target, smoothing)

    # Auto-selected tile (grid of 2 with a partial final tile).
    loss_auto = jax.block_until_ready(label_smoothing_loss(x, target, smoothing))
    assert jnp.allclose(loss_auto, ref, atol=1e-5, rtol=1e-5), (loss_auto, ref)

    # Explicit small tile (grid of 3) to exercise the accumulator across steps.
    loss_t8 = jax.block_until_ready(
        label_smoothing_loss(x, target, smoothing, tile_n=8))
    assert jnp.allclose(loss_t8, ref, atol=1e-5, rtol=1e-5), (loss_t8, ref)

    print("KERNEL_OK")
</pallas_src>

<mosaic_0001>
module attributes {stable_mosaic.version = 11 : i64} {
  func.func @_label_smoothing_kernel(%arg0: i32, %arg1: memref<16x32xf32, #tpu.memory_space<vmem>>, %arg2: memref<16x1xi32, #tpu.memory_space<vmem>>, %arg3: memref<1x1xf32, #tpu.memory_space<vmem>>) attributes {dimension_semantics = [#tpu.dimension_semantics<arbitrary>], iteration_bounds = array<i64: 2>, scalar_prefetch = 0 : i64, scratch_operands = 0 : i64, tpu.core_type = #tpu.core_type<tc>, window_params = [{transform_indices = @transform_0, window_bounds = array<i64: 16, 32>}, {transform_indices = @transform_1, window_bounds = array<i64: 16, 1>}, {pipeline_mode = #tpu.pipeline_mode<synchronous>, transform_indices = @transform_2, window_bounds = array<i64: 1, 1>}]} {
    %c0_i32 = arith.constant 0 : i32
    %0 = arith.cmpi eq, %arg0, %c0_i32 : i32
    %1 = arith.extui %0 : i1 to i32
    %c0_i32_0 = arith.constant 0 : i32
    %2 = arith.cmpi ne, %1, %c0_i32_0 : i32
    scf.if %2 {
      %cst_16 = arith.constant 0.000000e+00 : f32
      %43 = vector.broadcast %cst_16 : f32 to vector<1x1xf32>
      %c0_17 = arith.constant 0 : index
      %c0_18 = arith.constant 0 : index
      %44 = vector.load %arg3[%c0_17, %c0_18] : memref<1x1xf32, #tpu.memory_space<vmem>>, vector<1x1xf32>
      tpu.vector_store %arg3[%c0_17, %c0_18], %43 {strides = array<i32>} : memref<1x1xf32, #tpu.memory_space<vmem>>, vector<1x1xf32>,
    } else {
    }
    %c0 = arith.constant 0 : index
    %c0_1 = arith.constant 0 : index
    %3 = vector.load %arg1[%c0, %c0_1] : memref<16x32xf32, #tpu.memory_space<vmem>>, vector<16x32xf32>
    %c0_2 = arith.constant 0 : index
    %c0_3 = arith.constant 0 : index
    %4 = vector.load %arg2[%c0_2, %c0_3] : memref<16x1xi32, #tpu.memory_space<vmem>>, vector<16x1xi32>
    %cst = arith.constant dense<0xFF800000> : vector<16xf32>
    %5 = vector.multi_reduction <maximumf>, %3, %cst [1] : vector<16x32xf32> to vector<16xf32>
    %6 = vector.shape_cast %5 : vector<16xf32> to vector<16x1xf32>
    %7 = vector.broadcast %6 : vector<16x1xf32> to vector<16x32xf32>
    %8 = arith.subf %3, %7 : vector<16x32xf32>
    %9 = math.exp %8 : vector<16x32xf32>
    %cst_4 = arith.constant dense<0.000000e+00> : vector<16xf32>
    %10 = vector.multi_reduction <add>, %9, %cst_4 [1] : vector<16x32xf32> to vector<16xf32>
    %11 = vector.shape_cast %10 : vector<16xf32> to vector<16x1xf32>
    %12 = math.log %11 : vector<16x1xf32>
    %13 = tpu.iota {dimensions = array<i32: 1>} : vector<16x32xi32>
    %14 = vector.broadcast %4 : vector<16x1xi32> to vector<16x32xi32>
    %15 = arith.cmpi eq, %13, %14 : vector<16x32xi32>
    %cst_5 = arith.constant 3.125000e-03 : f32
    %cst_6 = arith.constant 0.899999976 : f32
    %16 = arith.addf %cst_5, %cst_6 : f32
    %cst_7 = arith.constant 3.125000e-03 : f32
    %17 = vector.broadcast %16 : f32 to vector<16x32xf32>
    %18 = vector.broadcast %cst_7 : f32 to vector<16x32xf32>
    %19 = arith.select %15, %17, %18 : vector<16x32xi1>, vector<16x32xf32>
    %20 = arith.mulf %8, %19 : vector<16x32xf32>
    %cst_8 = arith.constant dense<0.000000e+00> : vector<16xf32>
    %21 = vector.multi_reduction <add>, %20, %cst_8 [1] : vector<16x32xf32> to vector<16xf32>
    %22 = vector.shape_cast %21 : vector<16xf32> to vector<16x1xf32>
    %23 = arith.subf %12, %22 : vector<16x1xf32>
    %c16_i32 = arith.constant 16 : i32
    %24 = arith.muli %arg0, %c16_i32 : i32
    %25 = tpu.iota {dimensions = array<i32: 0>} : vector<16x1xi32>
    %26 = vector.broadcast %24 : i32 to vector<16x1xi32>
    %27 = arith.addi %26, %25 : vector<16x1xi32>
    %c20_i32 = arith.constant 20 : i32
    %28 = vector.broadcast %c20_i32 : i32 to vector<16x1xi32>
    %29 = arith.cmpi slt, %27, %28 : vector<16x1xi32>
    %cst_9 = arith.constant 0.000000e+00 : f32
    %30 = vector.broadcast %cst_9 : f32 to vector<16x1xf32>
    %31 = arith.select %29, %23, %30 : vector<16x1xi1>, vector<16x1xf32>
    %32 = vector.shape_cast %31 : vector<16x1xf32> to vector<1x16x1xf32>
    %cst_10 = arith.constant dense<0.000000e+00> : vector<1xf32>
    %33 = vector.multi_reduction <add>, %32, %cst_10 [1, 2] : vector<1x16x1xf32> to vector<1xf32>
    %34 = vector.shape_cast %33 : vector<1xf32> to vector<1x1x1xf32>
    %35 = vector.extract %34[0, 0, 0] : f32 from vector<1x1x1xf32>
    %36 = vector.broadcast %35 : f32 to vector<1x1xf32>
    %c0_11 = arith.constant 0 : index
    %c0_12 = arith.constant 0 : index
    %37 = vector.load %arg3[%c0_11, %c0_12] : memref<1x1xf32, #tpu.memory_space<vmem>>, vector<1x1xf32>
    %38 = arith.addf %37, %36 : vector<1x1xf32>
    %c0_13 = arith.constant 0 : index
    %c0_14 = arith.constant 0 : index
    %39 = vector.load %arg3[%c0_13, %c0_14] : memref<1x1xf32, #tpu.memory_space<vmem>>, vector<1x1xf32>
    tpu.vector_store %arg3[%c0_13, %c0_14], %38 {strides = array<i32>} : memref<1x1xf32, #tpu.memory_space<vmem>>, vector<1x1xf32>,
    %c1_i32 = arith.constant 1 : i32
    %40 = arith.cmpi eq, %arg0, %c1_i32 : i32
    %41 = arith.extui %40 : i1 to i32
    %c0_i32_15 = arith.constant 0 : i32
    %42 = arith.cmpi ne, %41, %c0_i32_15 : i32
    scf.if %42 {
      %c0_16 = arith.constant 0 : index
      %c0_17 = arith.constant 0 : index
      %43 = vector.load %arg3[%c0_16, %c0_17] : memref<1x1xf32, #tpu.memory_space<vmem>>, vector<1x1xf32>
      %cst_18 = arith.constant 2.000000e+01 : f32
      %44 = vector.broadcast %cst_18 : f32 to vector<1x1xf32>
      %45 = arith.divf %43, %44 : vector<1x1xf32>
      %c0_19 = arith.constant 0 : index
      %c0_20 = arith.constant 0 : index
      %46 = vector.load %arg3[%c0_19, %c0_20] : memref<1x1xf32, #tpu.memory_space<vmem>>, vector<1x1xf32>
      tpu.vector_store %arg3[%c0_19, %c0_20], %45 {strides = array<i32>} : memref<1x1xf32, #tpu.memory_space<vmem>>, vector<1x1xf32>,
    } else {
    }
    return
  }
  func.func @transform_0(%arg0: i32) -> (i32, i32) {
    %c0_i32 = arith.constant 0 : i32
    %c0_i32_0 = arith.constant 0 : i32
    return %arg0, %c0_i32 : i32, i32
  }
  func.func @transform_1(%arg0: i32) -> (i32, i32) {
    %c0_i32 = arith.constant 0 : i32
    %c0_i32_0 = arith.constant 0 : i32
    return %arg0, %c0_i32 : i32, i32
  }
  func.func @transform_2(%arg0: i32) -> (i32, i32) {
    %c0_i32 = arith.constant 0 : i32
    %c0_i32_0 = arith.constant 0 : i32
    %c0_i32_1 = arith.constant 0 : i32
    return %c0_i32, %c0_i32_0 : i32, i32
  }
}

</mosaic_0001>

<llo_original>
// kernel: tpu_custom_call.1
$region0: #{tpu_custom_call.1}
  #allocation0 [shape = 'u32[]', space=smem, size = 0x4, offset = 0x4, fixed_abs, tag = 'smem constant byte address 0x4 - core index']
  #allocation1 [shape = 'u32[72,128]{1,0:T(1,128)}', space=vmem, size = 0x9000, scoped, tag = 'internal scratch']
  %s0 = inlined_call_operand.vmem [shape: f32[20,32], index: 0, kind: input, shape index: {}]
  %s1 = inlined_call_operand.vmem [shape: s32[20,1], index: 1, kind: input, shape index: {}]
  %s2 = inlined_call_operand.hbm [shape: f32[1,1], index: 2, kind: output, shape index: {}]
  %s3 = sld [smem:[#allocation0]]
  $region49: #{tpu_custom_call.1} parent=0
    _
  %s5 = ssub.s32 1, %s3
  %s6 = scalar_select 0, %s5, %s3
  $region1: #{tpu_custom_call.1} parent=0
    #allocation2 [shape = 'u8[512]{0}', space=vmem, size = 0x400, scoped, tag = 'output window, operand 0, single buffered']
    #allocation3 [shape = 's32[2]{0}', space=sflag, size = 0x8, scoped, tag = 'scoped memory for tpu_custom_call.1']
    %7 = vsyncpa [#allocation3], 0
    loop: start=0, step=1, limit=4
    $region2: #{tpu_custom_call.1} parent=1 // loop_pre_header
      _
    $region3: #{tpu_custom_call.1} parent=1 // loop_header
      %s9 = sphi 0, %s13
      %p10 = scmp.ge.s32.totalorder %s9, 4
      %s19 = sphi 0, %s21
      %s22 = sphi 0, %s19
      %s23 = sphi 0, %s22
      %s39 = sphi 0, %s23
      %s45 = sphi 0, %s47
      %s48 = sphi 0, %s45
      %s49 = sphi 0, %s48
      %s65 = sphi 0, %s49
      %s69 = sphi 0, %s69
      %s71 = sphi 0, %s69
      %s72 = sphi 0, %s71
      %s86 = sphi 0, %s72
    $region4: #{tpu_custom_call.1} parent=1 // loop_header_branch
      %12 = sbr.rel (%p10) target = $region8
    $region5: #{tpu_custom_call.1} parent=1 // loop_body
      %s14 = ssub.s32 %s9, 1
      %s15 = ssub.s32 %s9, 2
      %s16 = sadd.s32 %s9, 1
      %s17 = ssub.s32 %s9, %s16
      %p18 = scmp.eq.s32.totalorder %s17, 0
      %s20 = sadd.s32 %s19, 1
      %s21 = scalar_select %p18, %s19, %s20
      %p24 = pneg %p18
      %p25 = scmp.eq.s32.totalorder %s9, 1
      %p26 = por %p24, %p25
      %p27 = scmp.ne.s32.totalorder %s19, %s22
      %p28 = scmp.eq.s32.totalorder %s9, 0
      %p29 = por %p27, %p28
      %p30 = scmp.ne.s32.totalorder %s19, %s22
      %p31 = scmp.eq.s32.totalorder %s14, 1
      %p32 = por %p30, %p31
      %p33 = scmp.ne.s32.totalorder %s22, %s23
      %p34 = scmp.eq.s32.totalorder %s14, 0
      %p35 = por %p33, %p34
      %p36 = scmp.ne.s32.totalorder %s22, %s23
      %p37 = scmp.eq.s32.totalorder %s15, 1
      %p38 = por %p36, %p37
      %p40 = scmp.ne.s32.totalorder %s23, %s39
      %p41 = scmp.eq.s32.totalorder %s15, 0
      %p42 = por %p40, %p41
      %s43 = ssub.s32 %s9, %s16
      %p44 = scmp.eq.s32.totalorder %s43, 0
      %s46 = sadd.s32 %s45, 1
      %s47 = scalar_select %p44, %s45, %s46
      %p50 = pneg %p44
      %p51 = scmp.eq.s32.totalorder %s9, 1
      %p52 = por %p50, %p51
      %p53 = scmp.ne.s32.totalorder %s45, %s48
      %p54 = scmp.eq.s32.totalorder %s9, 0
      %p55 = por %p53, %p54
      %p56 = scmp.ne.s32.totalorder %s45, %s48
      %p57 = scmp.eq.s32.totalorder %s14, 1
      %p58 = por %p56, %p57
      %p59 = scmp.ne.s32.totalorder %s48, %s49
      %p60 = scmp.eq.s32.totalorder %s14, 0
      %p61 = por %p59, %p60
      %p62 = scmp.ne.s32.totalorder %s48, %s49
      %p63 = scmp.eq.s32.totalorder %s15, 1
      %p64 = por %p62, %p63
      %p66 = scmp.ne.s32.totalorder %s49, %s65
      %p67 = scmp.eq.s32.totalorder %s15, 0
      %p68 = por %p66, %p67
      %s70 = sadd.s32 %s69, 1
      %p73 = scmp.eq.s32.totalorder %s9, 1
      %p74 = scmp.ne.s32.totalorder %s69, %s71
      %p75 = scmp.eq.s32.totalorder %s9, 0
      %p76 = por %p74, %p75
      %p77 = scmp.ne.s32.totalorder %s69, %s71
      %p78 = scmp.eq.s32.totalorder %s14, 1
      %p79 = por %p77, %p78
      %p80 = scmp.ne.s32.totalorder %s71, %s72
      %p81 = scmp.eq.s32.totalorder %s14, 0
      %p82 = por %p80, %p81
      %p83 = scmp.ne.s32.totalorder %s71, %s72
      %p84 = scmp.eq.s32.totalorder %s15, 1
      %p85 = por %p83, %p84
      %p87 = scmp.ne.s32.totalorder %s72, %s86
      %p88 = scmp.eq.s32.totalorder %s15, 0
      %p89 = por %p87, %p88
      %p90 = scmp.le.s32.totalorder 1, %s9
      %p91 = scmp.lt.s32.totalorder %s9, 3
      %p92 = pnand %p90, %p91
      %p93 = pneg %p92
      // Predicated region
      $region9: #{tpu_custom_call.1} parent=5 // pred_check
        _
      $region10: #{tpu_custom_call.1} parent=5 // pred_check_branch
        %95 = sbr.rel (%p92) target = $region12
      $region11: #{tpu_custom_call.1} parent=5 // pred_region
        %s96 = ssub.s32 %s9, 1
      $region12: #{tpu_custom_call.1} parent=5 // pred_fallthru
        _
      %p97 = scmp.lt.s32.totalorder %s9, 2
      // Predicated region
      $region13: #{tpu_custom_call.1} parent=5 // pred_check
        %p98 = pneg %p97
      $region14: #{tpu_custom_call.1} parent=5 // pred_check_branch
        %100 = sbr.rel (%p98) target = $region16
      $region15: #{tpu_custom_call.1} parent=5 // pred_region
        // Predicated region
        $region17: #{tpu_custom_call.1} parent=15 // pred_check
          %p101 = pneg %p29
        $region18: #{tpu_custom_call.1} parent=15 // pred_check_branch
          %103 = sbr.rel (%p101) target = $region20
        $region19: #{tpu_custom_call.1} parent=15 // pred_region
          %s104 = smul.u32 2, %s9
          %s105 = ssub.s32 3, %s104
          %p106 = scmp.lt.s32.totalorder %s105, 2
          %s107 = scalar_select %p106, %s105, 2
          %s108 = smul.u32 8, %s107
          %p109 = scmp.lt.s32.totalorder %s104, 2
          %s110 = scalar_select %p109, %s104, 2
          %s111 = smul.addr %s110, 8
          %s112 = scalar_lea.vmem %s0, %s111
          %s113 = smul.u32 2, %s9
          %s114 = ssub.s32 3, %s113
          %p115 = scmp.lt.s32.totalorder %s114, 2
          %s116 = scalar_select %p115, %s114, 2
          %s117 = smul.u32 8, %s116
        $region20: #{tpu_custom_call.1} parent=15 // pred_fallthru
          _
        // Predicated region
        $region21: #{tpu_custom_call.1} parent=15 // pred_check
          %p118 = pneg %p55
        $region22: #{tpu_custom_call.1} parent=15 // pred_check_branch
          %120 = sbr.rel (%p118) target = $region24
        $region23: #{tpu_custom_call.1} parent=15 // pred_region
          %s121 = smul.u32 2, %s9
          %s122 = ssub.s32 3, %s121
          %p123 = scmp.lt.s32.totalorder %s122, 2
          %s124 = scalar_select %p123, %s122, 2
          %s125 = smul.u32 8, %s124
          %p126 = scmp.lt.s32.totalorder %s121, 2
          %s127 = scalar_select %p126, %s121, 2
          %s128 = smul.addr %s127, 8
          %s129 = scalar_lea.vmem %s1, %s128
          %s130 = smul.u32 2, %s9
          %s131 = ssub.s32 3, %s130
          %p132 = scmp.lt.s32.totalorder %s131, 2
          %s133 = scalar_select %p132, %s131, 2
          %s134 = smul.u32 8, %s133
        $region24: #{tpu_custom_call.1} parent=15 // pred_fallthru
          _
      $region16: #{tpu_custom_call.1} parent=5 // pred_fallthru
        _
      %p135 = scmp.le.s32.totalorder 1, %s9
      %p136 = scmp.lt.s32.totalorder %s9, 3
      %p137 = pnand %p135, %p136
      %p138 = pneg %p137
      // Predicated region
      $region25: #{tpu_custom_call.1} parent=5 // pred_check
        _
      $region26: #{tpu_custom_call.1} parent=5 // pred_check_branch
        %140 = sbr.rel (%p137) target = $region28
      $region27: #{tpu_custom_call.1} parent=5 // pred_region
        %s141 = ssub.s32 %s9, 1
        %s142 = smul.u32 2, %s14
        %s143 = ssub.s32 3, %s142
        %p144 = scmp.lt.s32.totalorder %s143, 2
        %s145 = scalar_select %p144, %s143, 2
        %s146 = smul.u32 8, %s145
        %p147 = scmp.lt.s32.totalorder %s142, 2
        %s148 = scalar_select %p147, %s142, 2
        %s149 = smul.addr %s148, 8
        %s150 = scalar_lea.vmem %s0, %s149
        %p151 = pneg %p35
        %p152 = pneg %p32
        %s153 = smul.u32 2, %s14
        %s154 = ssub.s32 3, %s153
        %p155 = scmp.lt.s32.totalorder %s154, 2
        %s156 = scalar_select %p155, %s154, 2
        %s157 = smul.u32 8, %s156
        %p158 = scmp.lt.s32.totalorder %s153, 2
        %s159 = scalar_select %p158, %s153, 2
        %s160 = smul.addr %s159, 8
        %s161 = scalar_lea.vmem %s1, %s160
        %p162 = pneg %p61
        %p163 = pneg %p58
        %p164 = pneg %p82
        %p165 = pneg %p79
        %s166 = smul.u32 2, %s14
        %s167 = ssub.s32 3, %s166
        %p168 = scmp.lt.s32.totalorder %s167, 2
        %s169 = scalar_select %p168, %s167, 2
        %s170 = smul.u32 8, %s169
        %p171 = scmp.lt.s32.totalorder %s166, 2
        %s172 = scalar_select %p171, %s166, 2
        %s173 = smul.addr %s172, 8
        %s174 = scalar_lea.vmem %s0, %s173
        %s175 = smul.u32 2, %s14
        %s176 = ssub.s32 3, %s175
        %p177 = scmp.lt.s32.totalorder %s176, 2
        %s178 = scalar_select %p177, %s176, 2
        %s179 = smul.u32 8, %s178
        %s180 = smul.u32 2, %s14
        %s181 = ssub.s32 3, %s180
        %p182 = scmp.lt.s32.totalorder %s181, 2
        %s183 = scalar_select %p182, %s181, 2
        %s184 = smul.u32 8, %s183
        %p185 = scmp.lt.s32.totalorder %s180, 2
        %s186 = scalar_select %p185, %s180, 2
        %s187 = smul.addr %s186, 8
        %s188 = scalar_lea.vmem %s1, %s187
        %s189 = smul.u32 2, %s14
        %s190 = ssub.s32 3, %s189
        %p191 = scmp.lt.s32.totalorder %s190, 2
        %s192 = scalar_select %p191, %s190, 2
        %s193 = smul.u32 8, %s192
        %p194 = scmp.eq.s32.totalorder %s14, 0
        // Predicated region
        $region29: #{tpu_custom_call.1} parent=27 // pred_check
          %p195 = pneg %p194
        $region30: #{tpu_custom_call.1} parent=27 // pred_check_branch
          %197 = sbr.rel (%p195) target = $region32
        $region31: #{tpu_custom_call.1} parent=27 // pred_region
          %vm198 = vcmask 0
          %199 = vst.msk [vmem:[#allocation2] sm:$0x1] %vm198, 0.0
        $region32: #{tpu_custom_call.1} parent=27 // pred_fallthru
          _
        %v200 = vld [vmem:[%s174] sm:$0xff]
        %v201 = vld [vmem:[%s174 + $0x8] sm:$0xff]
        %v202 = vld [vmem:[%s188] sm:$0xff]
        %v203 = vld [vmem:[%s188 + $0x8] sm:$0xff]
        %vm204 = vcmask 261120
        %v205 = vsel %vm204, %v200, -inf
        %206 = vmax.xlane.f32.xlu0 %v205
        %v207 = vpop.xlane.xlu0 %206
        %v208 = vsel %vm204, %v201, -inf
        %209 = vmax.xlane.f32.xlu0 %v208
        %v210 = vpop.xlane.xlu0 %209
        %v211 = vsub.f32 %v200, %v207
        %v212 = vsub.f32 %v201, %v210
        %v213 = vmul.f32 %v211, 1.442695
        %v214 = vpow.pop %v213
        %v215 = vmul.f32 %v212, 1.442695
        %v216 = vpow.pop %v215
        %v217 = vsel %vm204, %v214, 0.0
        %218 = vadd.xlane.f32.xlu0 %v217
        %v219 = vpop.xlane.xlu0 %218
        %v220 = vsel %vm204, %v216, 0.0
        %221 = vadd.xlane.f32.xlu0 %v220
        %v222 = vpop.xlane.xlu0 %221
        %v223 = vlog2.pop %v219
        %v224 = vmul.f32 %v223, 0.6931472
        %v225 = vlog2.pop %v222
        %v226 = vmul.f32 %v225, 0.6931472
        %v227 = vlaneseq
        %v228 = vand.u32 %v227, 127
        %229 = vset.pattern.permute.xlu0 0
        %230 = vperm.xlu0 %229, %v202
        %v231 = vpop.permute.xlu0 %230
        %232 = vset.pattern.permute.xlu0 0
        %233 = vperm.xlu0 %232, %v203
        %v234 = vpop.permute.xlu0 %233
        %vm235 = vcmp.eq.s32.totalorder %v228, %v231
        %vm236 = vcmp.eq.s32.totalorder %v228, %v234
        %v237 = vsel %vm235, 0.903125, 0.003125
        %v238 = vsel %vm236, 0.903125, 0.003125
        %v239 = vmul.f32 %v211, %v237
        %v240 = vmul.f32 %v212, %v238
        %v241 = vsel %vm204, %v239, 0.0
        %242 = vadd.xlane.f32.xlu0 %v241
        %v243 = vpop.xlane.xlu0 %242
        %v244 = vsel %vm204, %v240, 0.0
        %245 = vadd.xlane.f32.xlu0 %v244
        %v246 = vpop.xlane.xlu0 %245
        %v247 = vsub.f32 %v224, %v243
        %v248 = vsub.f32 %v226, %v246
        %s249 = smul.u32 %s14, 16
        %v250 = vlaneseq
        %v251 = vshrl.u32 %v250, 7
        %v252 = vadd.s32 %v251, 8
        %v253 = vstv %s249
        %v254 = vadd.s32 %v253, %v251
        %v255 = vadd.s32 %v253, %v252
        %vm256 = vcmp.lt.s32.totalorder %v254, 20
        %vm257 = vcmp.lt.s32.totalorder %v255, 20
        %v258 = vsel %vm256, %v247, 0.0
        %v259 = vsel %vm257, %v248, 0.0
        %vm260 = vcmask 7168
        %v261 = vsel %vm260, %v258, 0.0
        %v262 = vsel %vm260, %v259, 0.0
        %v263 = vadd.f32 %v261, %v262
        %264 = vadd.xlane.f32.xlu0 %v263
        %v265 = vpop.xlane.xlu0 %264
        %v266 = vrot.slane %v265, 4
        %v267 = vadd.f32 %v265, %v266
        %v268 = vrot.slane %v267, 2
        %v269 = vadd.f32 %v267, %v268
        %v270 = vrot.slane %v269, 1
        %v271 = vadd.f32 %v269, %v270
        %s272 = vtos %v271
        %v273 = vstv %s272
        %v274 = vld [vmem:[#allocation2] sm:$0x1]
        %v275 = vadd.f32 %v274, %v273
        %vm276 = vcmask 0
        %277 = vst.msk [vmem:[#allocation2] sm:$0x1] %vm276, %v275
        %p278 = scmp.eq.s32.totalorder %s14, 1
        // Predicated region
        $region33: #{tpu_custom_call.1} parent=27 // pred_check
          %p279 = pneg %p278
        $region34: #{tpu_custom_call.1} parent=27 // pred_check_branch
          %281 = sbr.rel (%p279) target = $region36
        $region35: #{tpu_custom_call.1} parent=27 // pred_region
          %v282 = vld [vmem:[#allocation2] sm:$0x1]
          %v283 = vrcp.pop 20.0
          %v284 = vmul.f32 20.0, %v283
          %v285 = vsub.f32 1.0, %v284
          %v286 = vmul.f32 %v283, %v285
          %v287 = vadd.f32 %v283, %v286
          %vm288 = vweird.f32 %v283
          %v289 = vsel %vm288, %v283, %v287
          %v290 = vmul.f32 %v282, %v289
          %291 = vst.msk [vmem:[#allocation2] sm:$0x1] %vm276, %v290
        $region36: #{tpu_custom_call.1} parent=27 // pred_fallthru
          _
        // Predicated region
        $region37: #{tpu_custom_call.1} parent=27 // pred_check
          %p292 = pneg %p79
        $region38: #{tpu_custom_call.1} parent=27 // pred_check_branch
          %294 = sbr.rel (%p292) target = $region40
        $region39: #{tpu_custom_call.1} parent=27 // pred_region
          %296 = vsyncadd [#allocation3], 0
          %s298 = sshll.u32 [#allocation2], 4
          %s299 = int_to_ptr.vmem [resolvable:$true] %s298
          %s300 = sshll.u32 %s2, 4
          %s301 = int_to_ptr.hbm [resolvable:$true] %s300
          %303 = dma.vmem_to_hbm [thread:$0]  %s299, 16, %s301, [#allocation3]
        $region40: #{tpu_custom_call.1} parent=27 // pred_fallthru
          _
        // Predicated region
        $region41: #{tpu_custom_call.1} parent=27 // pred_check
          %p304 = pneg %p79
        $region42: #{tpu_custom_call.1} parent=27 // pred_check_branch
          %306 = sbr.rel (%p304) target = $region44
        $region43: #{tpu_custom_call.1} parent=27 // pred_region
          %308 = dma.done [#allocation3], 16
        $region44: #{tpu_custom_call.1} parent=27 // pred_fallthru
          _
      $region28: #{tpu_custom_call.1} parent=5 // pred_fallthru
        _
      %p309 = scmp.le.s32.totalorder 2, %s9
      // Predicated region
      $region45: #{tpu_custom_call.1} parent=5 // pred_check
        %p310 = pneg %p309
      $region46: #{tpu_custom_call.1} parent=5 // pred_check_branch
        %312 = sbr.rel (%p310) target = $region48
      $region47: #{tpu_custom_call.1} parent=5 // pred_region
        %s313 = ssub.s32 %s9, 2
      $region48: #{tpu_custom_call.1} parent=5 // pred_fallthru
        _
    $region6: #{tpu_custom_call.1} parent=1 // loop_footer
      %s13 = sadd.s32 1, %s9
    $region7: #{tpu_custom_call.1} parent=1 // loop_footer_branch
      %8 = sbr.rel target = $region3
    $region8: #{tpu_custom_call.1} parent=1 // loop_exit
      _
    %314 = vsyncpa [#allocation3], 1
    %s315 = scalar_lea.sflag [#allocation3], 1
    %316 = vsyncpa %s315, 1

</llo_original>
